<compile_context>
chip_gen: v6e
topology: v6e:2x2x1
jax: 0.10.0
libtpu: 0.0.40
codegen_flags: <defaults>
</compile_context>

<pallas_src>
import jax
import jax.numpy as jnp
from jax import lax
from jax.experimental import pallas as pl
from jax.experimental.pallas import tpu as pltpu

_MIB = 1024 * 1024


def _round_down(x, m):
    return max((int(x) // m) * m, 0)


def _round_up(x, m):
    return ((int(x) + m - 1) // m) * m


def _vmem_capacity_bytes():
    try:
        return int(pltpu.get_tpu_info().vmem_capacity_bytes)
    except Exception:
        return 64 * _MIB  # conservative (v7x-sized) fallback


# ----------------------------- kernels --------------------------------------


def _fused_linear_kernel(x_ref, w_ref, b_ref, o_ref):
    # x: (TB, D), w: (D, N), b: (1, N), o: (TB, N)
    acc = jnp.dot(x_ref[...], w_ref[...], preferred_element_type=jnp.float32)
    o_ref[...] = (acc + b_ref[...].astype(jnp.float32)).astype(o_ref.dtype)


def _fused_linear_kernel_t(x_ref, w_ref, b_ref, o_ref):
    # Lane-dense variant for tiny N: x: (TB, D), w: (N, D), b: (N, 1),
    # o: (N, TB).  Contract on D without transposing x in-kernel.
    acc = lax.dot_general(
        w_ref[...], x_ref[...],
        dimension_numbers=(((1,), (1,)), ((), ())),
        preferred_element_type=jnp.float32)
    o_ref[...] = (acc + b_ref[...].astype(jnp.float32)).astype(o_ref.dtype)


# --------------------------- parameter fusion --------------------------------


def fuse_output_layer_params(w_out, b_out, w_aux, b_aux, *, lane_dense=None):
    """One-time fusion of the two Linears (hoisted out of the per-call path).

    Column/row 0 of the fused weight corresponds to linear_out, 1..6 to
    linear_aux_out, reproducing torch.cat([result, aux_result], dim=1).

    lane_dense=True (default for D < 256): weight kept as (7, D), bias (7, 1);
    the kernel writes the output transposed (lane-dense stores).  Otherwise
    weight is (D, 7), bias (1, 7) and the output is written directly as (B, 7).
    """
    w = jnp.concatenate([w_out, w_aux], axis=0)   # (7, D)  (torch layout)
    b = jnp.concatenate([b_out, b_aux], axis=0)   # (7,)
    d = w.shape[1]
    if lane_dense is None:
        lane_dense = d < 256
    if lane_dense:
        return {"w": w, "b": b[:, None], "lane_dense": True}
    return {"w": w.T, "b": b[None, :], "lane_dense": False}


# ------------------------------ forward --------------------------------------


def custom_output_layer_forward(x, params, *, block_b=None):
    """out = cat([x @ W_out.T + b_out, x @ W_aux.T + b_aux], 1), shape (B, 7)."""
    B, D = x.shape
    lane_dense = params["lane_dense"]
    w, b = params["w"], params["b"]
    n_out = w.shape[0] if lane_dense else w.shape[1]
    out_dtype = x.dtype

    # Match the (tiny) weight's dtype to x; never cast x here (a wrapper-side
    # cast of x would add HBM traffic to an already HBM-bound op).  bf16 x
    # produced upstream -> bf16 weights, f32 MXU accumulation.
    if w.dtype != x.dtype:
        w = w.astype(x.dtype)

    itemsize = jnp.dtype(x.dtype).itemsize
    # Divisibility requirement of the block dim that tiles B:
    #   lane-dense path: block_b sits on the 128-lane axis of the output.
    #   direct path:     block_b sits on the 8-sublane axis.
    min_tile = 128 if lane_dense else 8

    # Generation-aware VMEM budget (64 MiB physical on v7x, 128 MiB v5e/v6e).
    vmem_cap = _vmem_capacity_bytes()
    vmem_limit = min(int(0.75 * vmem_cap), 112 * _MIB)

    if block_b is None:
        # VMEM bytes per batch row per buffer (128-lane / 8-sublane padded).
        x_row_vmem = max(_round_up(D, 128), 128) * itemsize
        out_row_vmem = (8 * itemsize) if lane_dense else (128 * itemsize)
        w_vmem = 2 * (_round_up(max(w.shape[0], 8), 8)
                      * _round_up(w.shape[1], 128) * itemsize + 4096)
        budget = int(0.80 * vmem_limit) - w_vmem
        bb_vmem = budget // (2 * (x_row_vmem + out_row_vmem))  # double-buffered
        # HBM target: ~8 MiB of x per tile (85%+ of roofline on all gens).
        bb_hbm = (8 * _MIB) // max(D * itemsize, 1)
        block_b = max(min_tile, _round_down(min(bb_vmem, bb_hbm), min_tile))
    else:
        block_b = max(min_tile, _round_down(block_b, min_tile))

    if block_b >= B:
        if B >= 2 * min_tile:
            # Ensure >= 2 grid steps so ("parallel",) can shard the batch
            # across v7x's two TensorCores (no-op on v5e/v6e).
            block_b = _round_up(pl.cdiv(B, 2), min_tile)
        else:
            block_b = B  # single full-extent block; no divisibility constraint

    grid = (pl.cdiv(B, block_b),)  # partial last block masked by Pallas
    cparams = pltpu.CompilerParams(
        dimension_semantics=("parallel",),
        vmem_limit_bytes=int(vmem_limit),
    )

    if lane_dense:
        out_t = pl.pallas_call(
            _fused_linear_kernel_t,
            out_shape=jax.ShapeDtypeStruct((n_out, B), out_dtype),
            grid=grid,
            in_specs=[
                pl.BlockSpec((block_b, D), lambda i: (i, 0)),  # streamed x
                pl.BlockSpec((n_out, D), lambda i: (0, 0)),    # resident weight
                pl.BlockSpec((n_out, 1), lambda i: (0, 0)),    # resident bias
            ],
            out_specs=pl.BlockSpec((n_out, block_b), lambda i: (0, i)),
            compiler_params=cparams,
        )(x, w, b)
        return out_t.T  # tiny (7, B) -> (B, 7)

    out = pl.pallas_call(
        _fused_linear_kernel,
        out_shape=jax.ShapeDtypeStruct((B, n_out), out_dtype),
        grid=grid,
        in_specs=[
            pl.BlockSpec((block_b, D), lambda i: (i, 0)),      # streamed x
            pl.BlockSpec((D, n_out), lambda i: (0, 0)),        # resident weight
            pl.BlockSpec((1, n_out), lambda i: (0, 0)),        # resident bias
        ],
        out_specs=pl.BlockSpec((block_b, n_out), lambda i: (i, 0)),
        compiler_params=cparams,
    )(x, w, b)
    return out


# ------------------------------- demo ----------------------------------------

if __name__ == "__main__":
    key = jax.random.PRNGKey(0)
    kx, kw1, kb1, kw2, kb2, kx2 = jax.random.split(key, 6)

    def make_params(D, k1, k2, k3, k4):
        bound = 1.0 / (D ** 0.5)
        w_out = jax.random.uniform(k1, (1, D), jnp.float32, -bound, bound)
        b_out = jax.random.uniform(k2, (1,), jnp.float32, -bound, bound)
        w_aux = jax.random.uniform(k3, (6, D), jnp.float32, -bound, bound)
        b_aux = jax.random.uniform(k4, (6,), jnp.float32, -bound, bound)
        return w_out, b_out, w_aux, b_aux

    def torch_ref(x, w_out, b_out, w_aux, b_aux):
        return jnp.concatenate([x @ w_out.T + b_out, x @ w_aux.T + b_aux], axis=1)

    # Case 1: small batch, small D -> lane-dense path, single full-extent block.
    D, B = 32, 4
    w_out, b_out, w_aux, b_aux = make_params(D, kw1, kb1, kw2, kb2)
    params = fuse_output_layer_params(w_out, b_out, w_aux, b_aux)
    x = jax.random.normal(kx, (B, D), dtype=jnp.float32)
    out = jax.block_until_ready(custom_output_layer_forward(x, params))
    ref = torch_ref(x, w_out, b_out, w_aux, b_aux)
    assert out.shape == (B, 7) and out.dtype == x.dtype
    assert jnp.allclose(out, ref, atol=1e-5, rtol=1e-5)

    # Case 2: ragged batch, small D -> lane-dense path, 2-step grid with a
    # masked partial last block (no wrapper-side padding copy).
    B2 = 300
    x2 = jax.random.normal(kx2, (B2, D), dtype=jnp.float32)
    out2 = jax.block_until_ready(custom_output_layer_forward(x2, params))
    ref2 = torch_ref(x2, w_out, b_out, w_aux, b_aux)
    assert out2.shape == (B2, 7)
    assert jnp.allclose(out2, ref2, atol=1e-5, rtol=1e-5)

    # Case 3: larger D -> direct (TB, 7) output layout, ragged 2-step grid.
    D3, B3 = 512, 300
    kw1b, kb1b, kw2b, kb2b, kx3 = jax.random.split(jax.random.PRNGKey(1), 5)
    w_out3, b_out3, w_aux3, b_aux3 = make_params(D3, kw1b, kb1b, kw2b, kb2b)
    params3 = fuse_output_layer_params(w_out3, b_out3, w_aux3, b_aux3)
    assert not params3["lane_dense"]
    x3 = jax.random.normal(kx3, (B3, D3), dtype=jnp.float32)
    out3 = jax.block_until_ready(custom_output_layer_forward(x3, params3))
    ref3 = torch_ref(x3, w_out3, b_out3, w_aux3, b_aux3)
    assert out3.shape == (B3, 7)
    assert jnp.allclose(out3, ref3, atol=1e-3, rtol=1e-3)

    # Case 4: bf16 activations produced upstream (no wrapper-side cast of x);
    # weights matched to x.dtype, f32 MXU accumulation.
    x4 = x2.astype(jnp.bfloat16)
    out4 = jax.block_until_ready(custom_output_layer_forward(x4, params))
    assert out4.shape == (B2, 7) and out4.dtype == jnp.bfloat16
    assert jnp.allclose(out4.astype(jnp.float32), ref2, atol=5e-2, rtol=5e-2)

    print("KERNEL_OK")
</pallas_src>

<mosaic_0001>
module attributes {stable_mosaic.version = 11 : i64} {
  func.func @_fused_linear_kernel_t(%arg0: i32, %arg1: memref<4x32xf32, #tpu.memory_space<vmem>>, %arg2: memref<7x32xf32, #tpu.memory_space<vmem>>, %arg3: memref<7x1xf32, #tpu.memory_space<vmem>>, %arg4: memref<7x4xf32, #tpu.memory_space<vmem>>) attributes {dimension_semantics = [#tpu.dimension_semantics<parallel>], iteration_bounds = array<i64: 1>, scalar_prefetch = 0 : i64, scratch_operands = 0 : i64, tpu.core_type = #tpu.core_type<tc>, window_params = [{transform_indices = @transform_0, window_bounds = array<i64: 4, 32>}, {pipeline_mode = #tpu.pipeline_mode<synchronous>, transform_indices = @transform_1, window_bounds = array<i64: 7, 32>}, {pipeline_mode = #tpu.pipeline_mode<synchronous>, transform_indices = @transform_2, window_bounds = array<i64: 7, 1>}, {transform_indices = @transform_3, window_bounds = array<i64: 7, 4>}]} {
    %c0 = arith.constant 0 : index
    %c0_0 = arith.constant 0 : index
    %0 = vector.load %arg2[%c0, %c0_0] : memref<7x32xf32, #tpu.memory_space<vmem>>, vector<7x32xf32>
    %c0_1 = arith.constant 0 : index
    %c0_2 = arith.constant 0 : index
    %1 = vector.load %arg1[%c0_1, %c0_2] : memref<4x32xf32, #tpu.memory_space<vmem>>, vector<4x32xf32>
    %cst = arith.constant dense<0.000000e+00> : vector<7x4xf32>
    %2 = tpu.matmul %0, %1, %cst {dimension_numbers = #tpu.dot_dimension_numbers<[1], [1], [0], [0], [0, 0, 1, 0], [], []>} : vector<7x32xf32>, vector<4x32xf32>, vector<7x4xf32> -> vector<7x4xf32>
    %c0_3 = arith.constant 0 : index
    %c0_4 = arith.constant 0 : index
    %3 = vector.load %arg3[%c0_3, %c0_4] : memref<7x1xf32, #tpu.memory_space<vmem>>, vector<7x1xf32>
    %4 = vector.broadcast %3 : vector<7x1xf32> to vector<7x4xf32>
    %5 = arith.addf %2, %4 : vector<7x4xf32>
    %c0_5 = arith.constant 0 : index
    %c0_6 = arith.constant 0 : index
    %6 = vector.load %arg4[%c0_5, %c0_6] : memref<7x4xf32, #tpu.memory_space<vmem>>, vector<7x4xf32>
    tpu.vector_store %arg4[%c0_5, %c0_6], %5 {strides = array<i32>} : memref<7x4xf32, #tpu.memory_space<vmem>>, vector<7x4xf32>,
    return
  }
  func.func @transform_0(%arg0: i32) -> (i32, i32) {
    %c0_i32 = arith.constant 0 : i32
    %c0_i32_0 = arith.constant 0 : i32
    return %arg0, %c0_i32 : i32, i32
  }
  func.func @transform_1(%arg0: i32) -> (i32, i32) {
    %c0_i32 = arith.constant 0 : i32
    %c0_i32_0 = arith.constant 0 : i32
    %c0_i32_1 = arith.constant 0 : i32
    return %c0_i32, %c0_i32_0 : i32, i32
  }
  func.func @transform_2(%arg0: i32) -> (i32, i32) {
    %c0_i32 = arith.constant 0 : i32
    %c0_i32_0 = arith.constant 0 : i32
    %c0_i32_1 = arith.constant 0 : i32
    return %c0_i32, %c0_i32_0 : i32, i32
  }
  func.func @transform_3(%arg0: i32) -> (i32, i32) {
    %c0_i32 = arith.constant 0 : i32
    %c0_i32_0 = arith.constant 0 : i32
    return %c0_i32, %arg0 : i32, i32
  }
}

</mosaic_0001>

<llo_original>
// kernel: tpu_custom_call.1
$region0: #{tpu_custom_call.1}
  #allocation0 [shape = 'u32[]', space=smem, size = 0x4, offset = 0x4, fixed_abs, tag = 'smem constant byte address 0x4 - core index']
  #allocation1 [shape = 'u32[144,128]{1,0:T(1,128)}', space=vmem, size = 0x12000, scoped, tag = 'internal scratch']
  %s0 = inlined_call_operand.hbm [shape: f32[4,32], index: 0, kind: input, shape index: {}]
  %s1 = inlined_call_operand.vmem [shape: f32[7,32], index: 1, kind: input, shape index: {}]
  %s2 = inlined_call_operand.vmem [shape: f32[7,1], index: 2, kind: input, shape index: {}]
  %s3 = inlined_call_operand.vmem [shape: f32[7,4], index: 3, kind: output, shape index: {}]
  %s4 = sld [smem:[#allocation0]]
  $region26: #{tpu_custom_call.1} parent=0
    _
  %s6 = ssub.s32 1, %s4
  %s7 = scalar_select 0, %s6, %s4
  $region1: #{tpu_custom_call.1} parent=0
    #allocation2 [shape = 'u8[2048]{0}', space=vmem, size = 0x800, scoped, tag = 'input window, operand 0, single buffered']
    #allocation3 [shape = 's32[1]{0}', space=sflag, size = 0x4, scoped, tag = 'scoped memory for tpu_custom_call.1']
    %8 = vsyncpa [#allocation3], 0
    // Predicated region
    $region2: #{tpu_custom_call.1} parent=1 // pred_check
      _
    $region3: #{tpu_custom_call.1} parent=1 // pred_check_branch
      %10 = sbr.rel (0) target = $region5
    $region4: #{tpu_custom_call.1} parent=1 // pred_region
      %s12 = ssub.s32 64, 64
      %13 = vsyncadd [#allocation3], %s12
      %s15 = sshll.u32 [#allocation2], 4
      %s16 = int_to_ptr.vmem [resolvable:$true] %s15
      %18 = dma.hbm_to_vmem [thread:$0]  %s0, 64, %s16, [#allocation3]
    $region5: #{tpu_custom_call.1} parent=1 // pred_fallthru
      _
    // Predicated region
    $region6: #{tpu_custom_call.1} parent=1 // pred_check
      _
    $region7: #{tpu_custom_call.1} parent=1 // pred_check_branch
      %20 = sbr.rel (0) target = $region9
    $region8: #{tpu_custom_call.1} parent=1 // pred_region
      _
    $region9: #{tpu_custom_call.1} parent=1 // pred_fallthru
      _
    // Predicated region
    $region10: #{tpu_custom_call.1} parent=1 // pred_check
      _
    $region11: #{tpu_custom_call.1} parent=1 // pred_check_branch
      %22 = sbr.rel (0) target = $region13
    $region12: #{tpu_custom_call.1} parent=1 // pred_region
      _
    $region13: #{tpu_custom_call.1} parent=1 // pred_fallthru
      _
    // Predicated region
    $region14: #{tpu_custom_call.1} parent=1 // pred_check
      _
    $region15: #{tpu_custom_call.1} parent=1 // pred_check_branch
      %24 = sbr.rel (0) target = $region17
    $region16: #{tpu_custom_call.1} parent=1 // pred_region
      %25 = dma.done [#allocation3], 64
    $region17: #{tpu_custom_call.1} parent=1 // pred_fallthru
      _
    %v26 = vld [vmem:[%s1] sm:$0x7f]
    %v27 = vld [vmem:[#allocation2] sm:$0xf]
    %v28 = vld [vmem:[%s2] sm:$0x7f]
    %30 = vset.pattern.permute.xlu0 0
    %31 = vperm.xlu0 %30, %v28
    %v32 = vpop.permute.xlu0 %31
    %vm34 = vcmask 261120
    %v36 = vsel %vm34, %v26, 0
    %v39 = vsel %vm34, %v27, 0
    %41 = vmatprep.subr.mxu0 0.0
    %42 = vmatpush1.xpose.msra.mxu0 0.0
    %43 = vmatprep.subr.mxu0 0.0
    %44 = vmatpush1.xpose.msra.mxu0 0.0
    %45 = vmatprep.subr.mxu0 0.0
    %46 = vmatpush1.xpose.msra.mxu0 0.0
    %47 = vmatprep.subr.mxu0 0.0
    %48 = vmatpush1.xpose.msra.mxu0 0.0
    %49 = vmatprep.subr.mxu0 0.0
    %50 = vmatpush1.xpose.msra.mxu0 0.0
    %51 = vmatprep.subr.mxu0 0.0
    %52 = vmatpush1.xpose.msra.mxu0 0.0
    %53 = vmatprep.subr.mxu0 0.0
    %54 = vmatpush1.xpose.msra.mxu0 0.0
    %55 = vmatprep.subr.mxu0 0.0
    %56 = vmatpush1.xpose.msra.mxu0 0.0
    %57 = vmatprep.subr.mxu0 0.0
    %58 = vmatpush1.xpose.msra.mxu0 0.0
    %59 = vmatprep.subr.mxu0 0.0
    %60 = vmatpush1.xpose.msra.mxu0 0.0
    %61 = vmatprep.subr.mxu0 0.0
    %62 = vmatpush1.xpose.msra.mxu0 0.0
    %63 = vmatprep.subr.mxu0 0.0
    %64 = vmatpush1.xpose.msra.mxu0 0.0
    %65 = vmatprep.subr.mxu0 0.0
    %66 = vmatpush1.xpose.msra.mxu0 0.0
    %67 = vmatprep.subr.mxu0 0.0
    %68 = vmatpush1.xpose.msra.mxu0 0.0
    %69 = vmatprep.subr.mxu0 0.0
    %70 = vmatpush1.xpose.msra.mxu0 0.0
    %71 = vmatprep.subr.mxu0 0.0
    %72 = vmatpush1.xpose.msra.mxu0 %v39
    %73 = vmatprep.subr.mxu0 0.0
    %74 = vmatpush2.xpose.msra.mxu0 0.0
    %75 = vmatprep.subr.mxu0 0.0
    %76 = vmatpush2.xpose.msra.mxu0 0.0
    %77 = vmatprep.subr.mxu0 0.0
    %78 = vmatpush2.xpose.msra.mxu0 0.0
    %79 = vmatprep.subr.mxu0 0.0
    %80 = vmatpush2.xpose.msra.mxu0 0.0
    %81 = vmatprep.subr.mxu0 0.0
    %82 = vmatpush2.xpose.msra.mxu0 0.0
    %83 = vmatprep.subr.mxu0 0.0
    %84 = vmatpush2.xpose.msra.mxu0 0.0
    %85 = vmatprep.subr.mxu0 0.0
    %86 = vmatpush2.xpose.msra.mxu0 0.0
    %87 = vmatprep.subr.mxu0 0.0
    %88 = vmatpush2.xpose.msra.mxu0 0.0
    %89 = vmatprep.subr.mxu0 0.0
    %90 = vmatpush2.xpose.msra.mxu0 0.0
    %91 = vmatprep.subr.mxu0 0.0
    %92 = vmatpush2.xpose.msra.mxu0 0.0
    %93 = vmatprep.subr.mxu0 0.0
    %94 = vmatpush2.xpose.msra.mxu0 0.0
    %95 = vmatprep.subr.mxu0 0.0
    %96 = vmatpush2.xpose.msra.mxu0 0.0
    %97 = vmatprep.subr.mxu0 0.0
    %98 = vmatpush2.xpose.msra.mxu0 0.0
    %99 = vmatprep.subr.mxu0 0.0
    %100 = vmatpush2.xpose.msra.mxu0 0.0
    %101 = vmatprep.subr.mxu0 0.0
    %102 = vmatpush2.xpose.msra.mxu0 0.0
    %103 = vmatprep.subr.mxu0 0.0
    %104 = vmatpush2.xpose.msra.mxu0 0.0
    %105 = vmatprep.mubr.f32.mxu0 0.0
    %106 = vmatmul.mubr.f32.gmra.mxu0 %v36
    %v107 = vpop.f32.mrf.mxu0
    %v108 = vadd.f32 %v32, %v107
    %v109 = vpop.f32.mrf.mxu0
    %110 = vdwg.mxu0
    %vm111 = vcmask 30720
    %112 = vst.msk [vmem:[%s3] sm:$0x7f] %vm111, %v108
    // Predicated region
    $region18: #{tpu_custom_call.1} parent=1 // pred_check
      _
    $region19: #{tpu_custom_call.1} parent=1 // pred_check_branch
      %114 = sbr.rel (0) target = $region21
    $region20: #{tpu_custom_call.1} parent=1 // pred_region
      _
    $region21: #{tpu_custom_call.1} parent=1 // pred_fallthru
      _
    // Predicated region
    $region22: #{tpu_custom_call.1} parent=1 // pred_check
      _
    $region23: #{tpu_custom_call.1} parent=1 // pred_check_branch
      %116 = sbr.rel (0) target = $region25
    $region24: #{tpu_custom_call.1} parent=1 // pred_region
      _
    $region25: #{tpu_custom_call.1} parent=1 // pred_fallthru
      _
    %117 = vsyncpa [#allocation3], 1

</llo_original>
